<compile_context>
chip_gen: v5e
topology: v5e:2x2
jax: 0.10.0
libtpu: 0.0.40
codegen_flags: <defaults>
</compile_context>

<pallas_src>
import jax
import jax.numpy as jnp
import numpy as np
from jax.experimental import pallas as pl
from jax.experimental.pallas import tpu as pltpu

EPS = float(jnp.finfo(jnp.float32).eps)  # matches torch.finfo(torch.float32).eps

# Problem sizes (small, consistent with the module's forward: x [M, H, K] -> [M, B, K])
M, H, B_OUT = 2, 8, 16                 # batch, in_channels, out_channels
K = 128                                # sequence length (one 128-lane tile per batch)
KSIZE, STRIDE, PAD, DIL = 3, 1, 1, 1   # padding keeps output length == K (non-causal)


def depthwise_separable_conv(x, dw, alpha, gamma, beta, pw,
                             ksize=KSIZE, pad=PAD, dil=DIL):
    """x: [M, H, K] f32, dw: [H, ksize], alpha: [1], gamma/beta: [1, H, 1],
    pw: [B_OUT, H]  ->  [M, B_OUT, K] f32 (PyTorch layout)."""
    Mb, Hc, Kl = x.shape
    Bo = pw.shape[0]
    MK = Mb * Kl
    inv_n = 1.0 / float(Hc * Kl)

    # ---- wrapper-side parameter plumbing / affine folding (tiny, one-time) ----
    dw3 = jnp.transpose(dw, (1, 0))[:, :, None]            # (KSIZE, H, 1)
    pwg = pw * gamma.reshape(1, Hc)                        # fold gLN gamma into 1x1 conv
    bias = pw @ beta.reshape(Hc, 1)                        # (B_OUT, 1) folded gLN beta

    def kernel(x_ref, dw_ref, alpha_ref, pwg_ref, bias_ref, o_ref, yc_ref):
        dwv = dw_ref[...]                                  # (KSIZE, H, 1), hoisted load
        alpha_v = alpha_ref[0]

        # Precompute boolean keep-masks for the boundary taps (one lane iota, reused).
        lane = jax.lax.broadcasted_iota(jnp.int32, (Hc, Kl), 1)
        keep = {}
        for k in range(ksize):
            s = pad - k * dil                              # static shift
            if s > 0:
                keep[k] = lane >= s
            elif s < 0:
                keep[k] = lane < Kl + s

        # --- per batch element: depthwise conv -> PReLU -> gLN, into the yc scratch ---
        for m in range(Mb):                                # static, tiny batch loop
            xm = x_ref[m]                                  # (H, K)

            acc = jnp.zeros((Hc, Kl), jnp.float32)
            for k in range(ksize):
                s = pad - k * dil
                if s == 0:
                    tap = xm
                else:
                    tap = jnp.where(keep[k], pltpu.roll(xm, s % Kl, axis=1), 0.0)
                acc = acc + tap * dwv[k]                   # (H,1) broadcasts along lanes

            # PReLU (single shared alpha)
            y = jnp.where(acc >= 0, acc, alpha_v * acc)

            # gLN stats: fused single pass (two independent reductions), var clamped.
            s1 = jnp.sum(y)
            s2 = jnp.sum(y * y)
            mu = s1 * inv_n
            var = jnp.maximum(s2 * inv_n - mu * mu, 0.0)
            inv = jax.lax.rsqrt(var + EPS)                 # EUP slot

            yc_ref[:, m * Kl:(m + 1) * Kl] = (y - mu) * inv

        # --- pointwise 1x1 conv: one batched MXU matmul over the (H, M*K) scratch ---
        out = jnp.dot(pwg_ref[...], yc_ref[...],
                      preferred_element_type=jnp.float32)  # (B_OUT, M*K)
        biasv = bias_ref[...]                              # (B_OUT, 1)
        for m in range(Mb):                                # lane-dense (B_OUT, K) stores
            o_ref[m] = (out[:, m * Kl:(m + 1) * Kl] + biasv).astype(o_ref.dtype)

    out = pl.pallas_call(
        kernel,
        out_shape=jax.ShapeDtypeStruct((Mb, Bo, Kl), jnp.float32),  # PyTorch layout
        in_specs=[
            pl.BlockSpec(memory_space=pltpu.MemorySpace.VMEM),   # x (M, H, K)
            pl.BlockSpec(memory_space=pltpu.MemorySpace.VMEM),   # dw3
            pl.BlockSpec(memory_space=pltpu.MemorySpace.SMEM),   # alpha (scalar)
            pl.BlockSpec(memory_space=pltpu.MemorySpace.VMEM),   # pwg
            pl.BlockSpec(memory_space=pltpu.MemorySpace.VMEM),   # bias
        ],
        out_specs=pl.BlockSpec(memory_space=pltpu.MemorySpace.VMEM),
        scratch_shapes=[pltpu.VMEM((Hc, MK), jnp.float32)],      # normalized yc slab
    )(x, dw3, alpha, pwg, bias)

    return out


def _reference(x, dw, alpha, gamma, beta, pw):
    """Pure-JAX reference mirroring the PyTorch forward (depthwise->PReLU->gLN->1x1)."""
    xpad = jnp.pad(x, ((0, 0), (0, 0), (PAD, PAD)))
    y = jnp.zeros((M, H, K), jnp.float32)
    for k in range(KSIZE):
        y = y + xpad[:, :, k * DIL: k * DIL + K] * dw[None, :, k:k + 1]
    y = jnp.where(y >= 0, y, alpha[0] * y)
    mean = y.mean(axis=(1, 2), keepdims=True)
    var = ((y - mean) ** 2).mean(axis=(1, 2), keepdims=True)
    yn = gamma * (y - mean) / jnp.sqrt(var + EPS) + beta
    return jnp.einsum('oh,mhk->mok', pw, yn)


if __name__ == "__main__":
    key = jax.random.PRNGKey(0)
    k1, k2, k3, k4, k5 = jax.random.split(key, 5)

    # Deterministic inputs / parameters (shapes from the module's __init__):
    x = jax.random.normal(k1, (M, H, K), jnp.float32)
    dw = jax.random.normal(k2, (H, KSIZE), jnp.float32) * 0.1   # Conv1d [H,1,ks] squeezed
    alpha = jnp.array([0.25], jnp.float32)                      # PReLU default
    # gLN params init to 1/0 in the module; perturb them to exercise the affine folding.
    gamma = 1.0 + 0.1 * jax.random.normal(k4, (1, H, 1), jnp.float32)
    beta = 0.1 * jax.random.normal(k5, (1, H, 1), jnp.float32)
    pw = jax.random.normal(k3, (B_OUT, H), jnp.float32) * 0.1   # Conv1d [B,H,1] squeezed

    out = depthwise_separable_conv(x, dw, alpha, gamma, beta, pw)
    out = jax.block_until_ready(out)

    ref = _reference(x, dw, alpha, gamma, beta, pw)
    np.testing.assert_allclose(np.asarray(out), np.asarray(ref), rtol=1e-5, atol=1e-5)

    print("KERNEL_OK")
</pallas_src>

<mosaic_0001>
module attributes {stable_mosaic.version = 11 : i64} {
  func.func @kernel(%arg0: memref<2x8x128xf32, #tpu.memory_space<vmem>>, %arg1: memref<3x8x1xf32, #tpu.memory_space<vmem>>, %arg2: memref<1xf32, #tpu.memory_space<smem>>, %arg3: memref<16x8xf32, #tpu.memory_space<vmem>>, %arg4: memref<16x1xf32, #tpu.memory_space<vmem>>, %arg5: memref<2x16x128xf32, #tpu.memory_space<vmem>>, %arg6: memref<8x256xf32, #tpu.memory_space<vmem>>) attributes {dimension_semantics = [], scalar_prefetch = 0 : i64, scratch_operands = 1 : i64, tpu.core_type = #tpu.core_type<tc>} {
    %c0 = arith.constant 0 : index
    %c0_0 = arith.constant 0 : index
    %c0_1 = arith.constant 0 : index
    %0 = vector.load %arg1[%c0, %c0_0, %c0_1] : memref<3x8x1xf32, #tpu.memory_space<vmem>>, vector<3x8x1xf32>
    %c0_2 = arith.constant 0 : index
    %1 = memref.load %arg2[%c0_2] : memref<1xf32, #tpu.memory_space<smem>>
    %2 = tpu.iota {dimensions = array<i32: 1>} : vector<8x128xi32>
    %c1_i32 = arith.constant 1 : i32
    %3 = vector.broadcast %c1_i32 : i32 to vector<8x128xi32>
    %4 = arith.cmpi sge, %2, %3 : vector<8x128xi32>
    %c127_i32 = arith.constant 127 : i32
    %5 = vector.broadcast %c127_i32 : i32 to vector<8x128xi32>
    %6 = arith.cmpi slt, %2, %5 : vector<8x128xi32>
    %c0_3 = arith.constant 0 : index
    %c0_4 = arith.constant 0 : index
    %c0_5 = arith.constant 0 : index
    %7 = vector.load %arg0[%c0_3, %c0_4, %c0_5] : memref<2x8x128xf32, #tpu.memory_space<vmem>>, vector<1x8x128xf32>
    %8 = vector.shape_cast %7 : vector<1x8x128xf32> to vector<8x128xf32>
    %cst = arith.constant 0.000000e+00 : f32
    %9 = vector.broadcast %cst : f32 to vector<8x128xf32>
    %c1_i32_6 = arith.constant 1 : i32
    %10 = tpu.dynamic_rotate %8 by %c1_i32_6 dim 1 : vector<8x128xf32>, i32 -> vector<8x128xf32>
    %cst_7 = arith.constant 0.000000e+00 : f32
    %11 = vector.broadcast %cst_7 : f32 to vector<8x128xf32>
    %12 = arith.select %4, %10, %11 : vector<8x128xi1>, vector<8x128xf32>
    %13 = vector.extract_strided_slice %0 {offsets = [0, 0, 0], sizes = [1, 8, 1], strides = [1, 1, 1]} : vector<3x8x1xf32> to vector<1x8x1xf32>
    %14 = vector.shape_cast %13 : vector<1x8x1xf32> to vector<8x1xf32>
    %15 = vector.broadcast %14 : vector<8x1xf32> to vector<8x128xf32>
    %16 = arith.mulf %12, %15 : vector<8x128xf32>
    %17 = arith.addf %9, %16 : vector<8x128xf32>
    %18 = vector.extract_strided_slice %0 {offsets = [1, 0, 0], sizes = [1, 8, 1], strides = [1, 1, 1]} : vector<3x8x1xf32> to vector<1x8x1xf32>
    %19 = vector.shape_cast %18 : vector<1x8x1xf32> to vector<8x1xf32>
    %20 = vector.broadcast %19 : vector<8x1xf32> to vector<8x128xf32>
    %21 = arith.mulf %8, %20 : vector<8x128xf32>
    %22 = arith.addf %17, %21 : vector<8x128xf32>
    %c127_i32_8 = arith.constant 127 : i32
    %23 = tpu.dynamic_rotate %8 by %c127_i32_8 dim 1 : vector<8x128xf32>, i32 -> vector<8x128xf32>
    %cst_9 = arith.constant 0.000000e+00 : f32
    %24 = vector.broadcast %cst_9 : f32 to vector<8x128xf32>
    %25 = arith.select %6, %23, %24 : vector<8x128xi1>, vector<8x128xf32>
    %26 = vector.extract_strided_slice %0 {offsets = [2, 0, 0], sizes = [1, 8, 1], strides = [1, 1, 1]} : vector<3x8x1xf32> to vector<1x8x1xf32>
    %27 = vector.shape_cast %26 : vector<1x8x1xf32> to vector<8x1xf32>
    %28 = vector.broadcast %27 : vector<8x1xf32> to vector<8x128xf32>
    %29 = arith.mulf %25, %28 : vector<8x128xf32>
    %30 = arith.addf %22, %29 : vector<8x128xf32>
    %cst_10 = arith.constant 0.000000e+00 : f32
    %31 = vector.broadcast %cst_10 : f32 to vector<8x128xf32>
    %32 = arith.cmpf oge, %30, %31 : vector<8x128xf32>
    %33 = vector.broadcast %1 : f32 to vector<8x128xf32>
    %34 = arith.mulf %33, %30 : vector<8x128xf32>
    %35 = arith.select %32, %30, %34 : vector<8x128xi1>, vector<8x128xf32>
    %36 = vector.shape_cast %35 : vector<8x128xf32> to vector<1x8x128xf32>
    %cst_11 = arith.constant dense<0.000000e+00> : vector<1xf32>
    %37 = vector.multi_reduction <add>, %36, %cst_11 [1, 2] : vector<1x8x128xf32> to vector<1xf32>
    %38 = vector.shape_cast %37 : vector<1xf32> to vector<1x1x1xf32>
    %39 = vector.extract %38[0, 0, 0] : f32 from vector<1x1x1xf32>
    %40 = arith.mulf %35, %35 : vector<8x128xf32>
    %41 = vector.shape_cast %40 : vector<8x128xf32> to vector<1x8x128xf32>
    %cst_12 = arith.constant dense<0.000000e+00> : vector<1xf32>
    %42 = vector.multi_reduction <add>, %41, %cst_12 [1, 2] : vector<1x8x128xf32> to vector<1xf32>
    %43 = vector.shape_cast %42 : vector<1xf32> to vector<1x1x1xf32>
    %44 = vector.extract %43[0, 0, 0] : f32 from vector<1x1x1xf32>
    %cst_13 = arith.constant 9.765625E-4 : f32
    %45 = arith.mulf %39, %cst_13 : f32
    %cst_14 = arith.constant 9.765625E-4 : f32
    %46 = arith.mulf %44, %cst_14 : f32
    %47 = arith.mulf %45, %45 : f32
    %48 = arith.subf %46, %47 : f32
    %cst_15 = arith.constant 0.000000e+00 : f32
    %49 = arith.maximumf %48, %cst_15 : f32
    %cst_16 = arith.constant 1.1920929E-7 : f32
    %50 = arith.addf %49, %cst_16 : f32
    %51 = math.rsqrt %50 : f32
    %52 = vector.broadcast %45 : f32 to vector<8x128xf32>
    %53 = arith.subf %35, %52 : vector<8x128xf32>
    %54 = vector.broadcast %51 : f32 to vector<8x128xf32>
    %55 = arith.mulf %53, %54 : vector<8x128xf32>
    %c0_17 = arith.constant 0 : index
    %c0_18 = arith.constant 0 : index
    %56 = vector.load %arg6[%c0_17, %c0_18] : memref<8x256xf32, #tpu.memory_space<vmem>>, vector<8x128xf32>
    tpu.vector_store %arg6[%c0_17, %c0_18], %55 {strides = array<i32>} : memref<8x256xf32, #tpu.memory_space<vmem>>, vector<8x128xf32>,
    %c1 = arith.constant 1 : index
    %c0_19 = arith.constant 0 : index
    %c0_20 = arith.constant 0 : index
    %57 = vector.load %arg0[%c1, %c0_19, %c0_20] : memref<2x8x128xf32, #tpu.memory_space<vmem>>, vector<1x8x128xf32>
    %58 = vector.shape_cast %57 : vector<1x8x128xf32> to vector<8x128xf32>
    %cst_21 = arith.constant 0.000000e+00 : f32
    %59 = vector.broadcast %cst_21 : f32 to vector<8x128xf32>
    %c1_i32_22 = arith.constant 1 : i32
    %60 = tpu.dynamic_rotate %58 by %c1_i32_22 dim 1 : vector<8x128xf32>, i32 -> vector<8x128xf32>
    %cst_23 = arith.constant 0.000000e+00 : f32
    %61 = vector.broadcast %cst_23 : f32 to vector<8x128xf32>
    %62 = arith.select %4, %60, %61 : vector<8x128xi1>, vector<8x128xf32>
    %63 = vector.extract_strided_slice %0 {offsets = [0, 0, 0], sizes = [1, 8, 1], strides = [1, 1, 1]} : vector<3x8x1xf32> to vector<1x8x1xf32>
    %64 = vector.shape_cast %63 : vector<1x8x1xf32> to vector<8x1xf32>
    %65 = vector.broadcast %64 : vector<8x1xf32> to vector<8x128xf32>
    %66 = arith.mulf %62, %65 : vector<8x128xf32>
    %67 = arith.addf %59, %66 : vector<8x128xf32>
    %68 = vector.extract_strided_slice %0 {offsets = [1, 0, 0], sizes = [1, 8, 1], strides = [1, 1, 1]} : vector<3x8x1xf32> to vector<1x8x1xf32>
    %69 = vector.shape_cast %68 : vector<1x8x1xf32> to vector<8x1xf32>
    %70 = vector.broadcast %69 : vector<8x1xf32> to vector<8x128xf32>
    %71 = arith.mulf %58, %70 : vector<8x128xf32>
    %72 = arith.addf %67, %71 : vector<8x128xf32>
    %c127_i32_24 = arith.constant 127 : i32
    %73 = tpu.dynamic_rotate %58 by %c127_i32_24 dim 1 : vector<8x128xf32>, i32 -> vector<8x128xf32>
    %cst_25 = arith.constant 0.000000e+00 : f32
    %74 = vector.broadcast %cst_25 : f32 to vector<8x128xf32>
    %75 = arith.select %6, %73, %74 : vector<8x128xi1>, vector<8x128xf32>
    %76 = vector.extract_strided_slice %0 {offsets = [2, 0, 0], sizes = [1, 8, 1], strides = [1, 1, 1]} : vector<3x8x1xf32> to vector<1x8x1xf32>
    %77 = vector.shape_cast %76 : vector<1x8x1xf32> to vector<8x1xf32>
    %78 = vector.broadcast %77 : vector<8x1xf32> to vector<8x128xf32>
    %79 = arith.mulf %75, %78 : vector<8x128xf32>
    %80 = arith.addf %72, %79 : vector<8x128xf32>
    %cst_26 = arith.constant 0.000000e+00 : f32
    %81 = vector.broadcast %cst_26 : f32 to vector<8x128xf32>
    %82 = arith.cmpf oge, %80, %81 : vector<8x128xf32>
    %83 = vector.broadcast %1 : f32 to vector<8x128xf32>
    %84 = arith.mulf %83, %80 : vector<8x128xf32>
    %85 = arith.select %82, %80, %84 : vector<8x128xi1>, vector<8x128xf32>
    %86 = vector.shape_cast %85 : vector<8x128xf32> to vector<1x8x128xf32>
    %cst_27 = arith.constant dense<0.000000e+00> : vector<1xf32>
    %87 = vector.multi_reduction <add>, %86, %cst_27 [1, 2] : vector<1x8x128xf32> to vector<1xf32>
    %88 = vector.shape_cast %87 : vector<1xf32> to vector<1x1x1xf32>
    %89 = vector.extract %88[0, 0, 0] : f32 from vector<1x1x1xf32>
    %90 = arith.mulf %85, %85 : vector<8x128xf32>
    %91 = vector.shape_cast %90 : vector<8x128xf32> to vector<1x8x128xf32>
    %cst_28 = arith.constant dense<0.000000e+00> : vector<1xf32>
    %92 = vector.multi_reduction <add>, %91, %cst_28 [1, 2] : vector<1x8x128xf32> to vector<1xf32>
    %93 = vector.shape_cast %92 : vector<1xf32> to vector<1x1x1xf32>
    %94 = vector.extract %93[0, 0, 0] : f32 from vector<1x1x1xf32>
    %cst_29 = arith.constant 9.765625E-4 : f32
    %95 = arith.mulf %89, %cst_29 : f32
    %cst_30 = arith.constant 9.765625E-4 : f32
    %96 = arith.mulf %94, %cst_30 : f32
    %97 = arith.mulf %95, %95 : f32
    %98 = arith.subf %96, %97 : f32
    %cst_31 = arith.constant 0.000000e+00 : f32
    %99 = arith.maximumf %98, %cst_31 : f32
    %cst_32 = arith.constant 1.1920929E-7 : f32
    %100 = arith.addf %99, %cst_32 : f32
    %101 = math.rsqrt %100 : f32
    %102 = vector.broadcast %95 : f32 to vector<8x128xf32>
    %103 = arith.subf %85, %102 : vector<8x128xf32>
    %104 = vector.broadcast %101 : f32 to vector<8x128xf32>
    %105 = arith.mulf %103, %104 : vector<8x128xf32>
    %c0_33 = arith.constant 0 : index
    %c128 = arith.constant 128 : index
    %106 = vector.load %arg6[%c0_33, %c128] : memref<8x256xf32, #tpu.memory_space<vmem>>, vector<8x128xf32>
    tpu.vector_store %arg6[%c0_33, %c128], %105 {strides = array<i32>} : memref<8x256xf32, #tpu.memory_space<vmem>>, vector<8x128xf32>,
    %c0_34 = arith.constant 0 : index
    %c0_35 = arith.constant 0 : index
    %107 = vector.load %arg3[%c0_34, %c0_35] : memref<16x8xf32, #tpu.memory_space<vmem>>, vector<16x8xf32>
    %c0_36 = arith.constant 0 : index
    %c0_37 = arith.constant 0 : index
    %108 = vector.load %arg6[%c0_36, %c0_37] : memref<8x256xf32, #tpu.memory_space<vmem>>, vector<8x256xf32>
    %cst_38 = arith.constant dense<0.000000e+00> : vector<16x256xf32>
    %109 = tpu.matmul %107, %108, %cst_38 {dimension_numbers = #tpu.dot_dimension_numbers<[1], [0], [0], [1], [0, 0, 1, 1], [], []>} : vector<16x8xf32>, vector<8x256xf32>, vector<16x256xf32> -> vector<16x256xf32>
    %c0_39 = arith.constant 0 : index
    %c0_40 = arith.constant 0 : index
    %110 = vector.load %arg4[%c0_39, %c0_40] : memref<16x1xf32, #tpu.memory_space<vmem>>, vector<16x1xf32>
    %111 = vector.extract_strided_slice %109 {offsets = [0, 0], sizes = [16, 128], strides = [1, 1]} : vector<16x256xf32> to vector<16x128xf32>
    %112 = vector.broadcast %110 : vector<16x1xf32> to vector<16x128xf32>
    %113 = arith.addf %111, %112 : vector<16x128xf32>
    %c0_41 = arith.constant 0 : index
    %c0_42 = arith.constant 0 : index
    %c0_43 = arith.constant 0 : index
    %114 = vector.load %arg5[%c0_41, %c0_42, %c0_43] : memref<2x16x128xf32, #tpu.memory_space<vmem>>, vector<1x16x128xf32>
    %115 = vector.shape_cast %114 : vector<1x16x128xf32> to vector<16x128xf32>
    %116 = vector.shape_cast %113 : vector<16x128xf32> to vector<1x16x128xf32>
    tpu.vector_store %arg5[%c0_41, %c0_42, %c0_43], %116 {strides = array<i32>} : memref<2x16x128xf32, #tpu.memory_space<vmem>>, vector<1x16x128xf32>,
    %117 = vector.extract_strided_slice %109 {offsets = [0, 128], sizes = [16, 128], strides = [1, 1]} : vector<16x256xf32> to vector<16x128xf32>
    %118 = vector.broadcast %110 : vector<16x1xf32> to vector<16x128xf32>
    %119 = arith.addf %117, %118 : vector<16x128xf32>
    %c1_44 = arith.constant 1 : index
    %c0_45 = arith.constant 0 : index
    %c0_46 = arith.constant 0 : index
    %120 = vector.load %arg5[%c1_44, %c0_45, %c0_46] : memref<2x16x128xf32, #tpu.memory_space<vmem>>, vector<1x16x128xf32>
    %121 = vector.shape_cast %120 : vector<1x16x128xf32> to vector<16x128xf32>
    %122 = vector.shape_cast %119 : vector<16x128xf32> to vector<1x16x128xf32>
    tpu.vector_store %arg5[%c1_44, %c0_45, %c0_46], %122 {strides = array<i32>} : memref<2x16x128xf32, #tpu.memory_space<vmem>>, vector<1x16x128xf32>,
    return
  }
}

</mosaic_0001>

<llo_original>
// kernel: tpu_custom_call.1
$region0: #{tpu_custom_call.1}
  #allocation0 [shape = 'u32[]', space=smem, size = 0x4, offset = 0x4, fixed_abs, tag = 'smem constant byte address 0x4 - core index']
  #allocation1 [shape = 'u32[72,128]{1,0:T(1,128)}', space=vmem, size = 0x9000, scoped, tag = 'internal scratch']
  #allocation2 [shape = 'f32[8,256]{1,0:T(8,128)}', space=vmem, size = 0x2000, scoped, tag = 'scratch operand']
  #allocation3 [shape = 'f32[1]{0:T(128)S(6)}', space=smem, size = 0x200, scoped, tag = 'scoped memory for tpu_custom_call.1']
  %s0 = inlined_call_operand.vmem [shape: f32[2,8,128], index: 0, kind: input, shape index: {}]
  %s1 = inlined_call_operand.vmem [shape: f32[3,8,1], index: 1, kind: input, shape index: {}]
  %s2 = inlined_call_operand.<no memory space> [shape: f32[1], index: 2, kind: input, shape index: {}]
  %s3 = inlined_call_operand.vmem [shape: f32[16,8], index: 3, kind: input, shape index: {}]
  %s4 = inlined_call_operand.vmem [shape: f32[16,1], index: 4, kind: input, shape index: {}]
  %s5 = inlined_call_operand.hbm [shape: f32[2,16,128], index: 5, kind: output, shape index: {}]
  %s6 = sld [smem:[#allocation0]]
  $region30: #{tpu_custom_call.1} parent=0
    _
  %s8 = ssub.s32 1, %s6
  %s9 = scalar_select 0, %s8, %s6
  %10 = sst [smem:[#allocation3]] %s2
  $region1: #{tpu_custom_call.1} parent=0
    #allocation4 [shape = 'u8[16384]{0}', space=vmem, size = 0x4000, scoped, tag = 'output window, operand 0, single buffered']
    #allocation5 [shape = 's32[1]{0}', space=sflag, size = 0x4, scoped, tag = 'scoped memory for tpu_custom_call.1']
    %11 = vsyncpa [#allocation5], 0
    // Predicated region
    $region2: #{tpu_custom_call.1} parent=1 // pred_check
      _
    $region3: #{tpu_custom_call.1} parent=1 // pred_check_branch
      %13 = sbr.rel (0) target = $region5
    $region4: #{tpu_custom_call.1} parent=1 // pred_region
      _
    $region5: #{tpu_custom_call.1} parent=1 // pred_fallthru
      _
    // Predicated region
    $region6: #{tpu_custom_call.1} parent=1 // pred_check
      _
    $region7: #{tpu_custom_call.1} parent=1 // pred_check_branch
      %15 = sbr.rel (0) target = $region9
    $region8: #{tpu_custom_call.1} parent=1 // pred_region
      _
    $region9: #{tpu_custom_call.1} parent=1 // pred_fallthru
      _
    // Predicated region
    $region10: #{tpu_custom_call.1} parent=1 // pred_check
      _
    $region11: #{tpu_custom_call.1} parent=1 // pred_check_branch
      %17 = sbr.rel (0) target = $region13
    $region12: #{tpu_custom_call.1} parent=1 // pred_region
      _
    $region13: #{tpu_custom_call.1} parent=1 // pred_fallthru
      _
    // Predicated region
    $region14: #{tpu_custom_call.1} parent=1 // pred_check
      _
    $region15: #{tpu_custom_call.1} parent=1 // pred_check_branch
      %19 = sbr.rel (0) target = $region17
    $region16: #{tpu_custom_call.1} parent=1 // pred_region
      _
    $region17: #{tpu_custom_call.1} parent=1 // pred_fallthru
      _
    // Predicated region
    $region18: #{tpu_custom_call.1} parent=1 // pred_check
      _
    $region19: #{tpu_custom_call.1} parent=1 // pred_check_branch
      %21 = sbr.rel (0) target = $region21
    $region20: #{tpu_custom_call.1} parent=1 // pred_region
      _
    $region21: #{tpu_custom_call.1} parent=1 // pred_fallthru
      _
    %v22 = vld [vmem:[%s1] sm:$0xff]
    %v23 = vld [vmem:[%s1 + $0x8] sm:$0xff]
    %v24 = vld [vmem:[%s1 + $0x10] sm:$0xff]
    %s25 = sld [smem:[#allocation3]]
    %v26 = vlaneseq
    %v27 = vand.u32 %v26, 127
    %vm28 = vcmp.ge.s32.totalorder %v27, 1
    %vm29 = vcmp.lt.s32.totalorder %v27, 127
    %v30 = vld [vmem:[%s0] sm:$0xff]
    %31 = vrot.lane.b32.xlu0 %v30, 1
    %v32 = vpop.permute.xlu0 %31
    %v33 = vsel %vm28, %v32, 0.0
    %35 = vset.pattern.permute.xlu0 0
    %36 = vperm.xlu0 %35, %v22
    %v37 = vpop.permute.xlu0 %36
    %v39 = vmul.f32 %v33, %v37
    %v40 = vadd.f32 %v39, 0.0
    %42 = vset.pattern.permute.xlu0 0
    %43 = vperm.xlu0 %42, %v23
    %v44 = vpop.permute.xlu0 %43
    %v46 = vmul.f32 %v30, %v44
    %v47 = vadd.f32 %v40, %v46
    %48 = vrot.lane.b32.xlu0 %v30, 127
    %v49 = vpop.permute.xlu0 %48
    %v50 = vsel %vm29, %v49, 0.0
    %52 = vset.pattern.permute.xlu0 0
    %53 = vperm.xlu0 %52, %v24
    %v54 = vpop.permute.xlu0 %53
    %v56 = vmul.f32 %v50, %v54
    %v57 = vadd.f32 %v47, %v56
    %vm58 = vcmp.ge.f32.partialorder %v57, 0.0
    %v59 = vstv %s25
    %v60 = vmul.f32 %v59, %v57
    %v61 = vsel %vm58, %v57, %v60
    %62 = vadd.xlane.f32.xlu0 %v61
    %v63 = vpop.xlane.xlu0 %62
    %v64 = vrot.slane %v63, 4
    %v65 = vadd.f32 %v63, %v64
    %v66 = vrot.slane %v65, 2
    %v67 = vadd.f32 %v65, %v66
    %v68 = vrot.slane %v67, 1
    %v69 = vadd.f32 %v67, %v68
    %s70 = vtos %v69
    %v71 = vmul.f32 %v61, %v61
    %72 = vadd.xlane.f32.xlu0 %v71
    %v73 = vpop.xlane.xlu0 %72
    %v74 = vrot.slane %v73, 4
    %v75 = vadd.f32 %v73, %v74
    %v76 = vrot.slane %v75, 2
    %v77 = vadd.f32 %v75, %v76
    %v78 = vrot.slane %v77, 1
    %v79 = vadd.f32 %v77, %v78
    %s80 = vtos %v79
    %s81 = smul.f32 %s70, 0.0009765625
    %s82 = smul.f32 %s80, 0.0009765625
    %s83 = smul.f32 %s81, %s81
    %s84 = ssub.f32 %s82, %s83
    %s85 = smax.f32 %s84, 0.0
    %s86 = sadd.f32 %s85, 1.1920929e-07
    %v87 = vstv %s86
    %v88 = vrsqrt.pop %v87
    %v89 = vmul.f32 %v88, %v87
    %v90 = vmul.f32 %v89, %v88
    %v91 = vmul.f32 0.5, %v90
    %v92 = vsub.f32 1.5, %v91
    %v93 = vmul.f32 %v88, %v92
    %vm94 = vweird.f32 %v87
    %vm95 = vweird.f32 %v88
    %vm96 = vmor %vm94, %vm95
    %v97 = vsel %vm96, %v88, %v93
    %s98 = vtos %v97
    %v99 = vstv %s81
    %v100 = vsub.f32 %v61, %v99
    %v101 = vstv %s98
    %v102 = vmul.f32 %v100, %v101
    %103 = vst [vmem:[#allocation2] sm:$0xff] %v102
    %s104 = scalar_lea.vmem %s0, 8
    %v105 = vld [vmem:[%s104] sm:$0xff]
    %106 = vrot.lane.b32.xlu0 %v105, 1
    %v107 = vpop.permute.xlu0 %106
    %v108 = vsel %vm28, %v107, 0.0
    %v109 = vmul.f32 %v108, %v37
    %v110 = vadd.f32 %v109, 0.0
    %v111 = vmul.f32 %v105, %v44
    %v112 = vadd.f32 %v110, %v111
    %113 = vrot.lane.b32.xlu0 %v105, 127
    %v114 = vpop.permute.xlu0 %113
    %v115 = vsel %vm29, %v114, 0.0
    %v116 = vmul.f32 %v115, %v54
    %v117 = vadd.f32 %v112, %v116
    %vm118 = vcmp.ge.f32.partialorder %v117, 0.0
    %v119 = vmul.f32 %v59, %v117
    %v120 = vsel %vm118, %v117, %v119
    %121 = vadd.xlane.f32.xlu0 %v120
    %v122 = vpop.xlane.xlu0 %121
    %v123 = vrot.slane %v122, 4
    %v124 = vadd.f32 %v122, %v123
    %v125 = vrot.slane %v124, 2
    %v126 = vadd.f32 %v124, %v125
    %v127 = vrot.slane %v126, 1
    %v128 = vadd.f32 %v126, %v127
    %s129 = vtos %v128
    %v130 = vmul.f32 %v120, %v120
    %131 = vadd.xlane.f32.xlu0 %v130
    %v132 = vpop.xlane.xlu0 %131
    %v133 = vrot.slane %v132, 4
    %v134 = vadd.f32 %v132, %v133
    %v135 = vrot.slane %v134, 2
    %v136 = vadd.f32 %v134, %v135
    %v137 = vrot.slane %v136, 1
    %v138 = vadd.f32 %v136, %v137
    %s139 = vtos %v138
    %s140 = smul.f32 %s129, 0.0009765625
    %s141 = smul.f32 %s139, 0.0009765625
    %s142 = smul.f32 %s140, %s140
    %s143 = ssub.f32 %s141, %s142
    %s144 = smax.f32 %s143, 0.0
    %s145 = sadd.f32 %s144, 1.1920929e-07
    %v146 = vstv %s145
    %v147 = vrsqrt.pop %v146
    %v148 = vmul.f32 %v147, %v146
    %v149 = vmul.f32 %v148, %v147
    %v150 = vmul.f32 0.5, %v149
    %v151 = vsub.f32 1.5, %v150
    %v152 = vmul.f32 %v147, %v151
    %vm153 = vweird.f32 %v146
    %vm154 = vweird.f32 %v147
    %vm155 = vmor %vm153, %vm154
    %v156 = vsel %vm155, %v147, %v152
    %s157 = vtos %v156
    %v158 = vstv %s140
    %v159 = vsub.f32 %v120, %v158
    %v160 = vstv %s157
    %v161 = vmul.f32 %v159, %v160
    %162 = vst [vmem:[#allocation2 + $0x8] sm:$0xff] %v161
    %v163 = vld [vmem:[%s3] sm:$0xff]
    %v164 = vld [vmem:[%s3 + $0x8] sm:$0xff]
    %v165 = vld [vmem:[#allocation2] sm:$0xff]
    %v166 = vld [vmem:[#allocation2 + $0x8] sm:$0xff]
    %vm167 = vcmask 64512
    %v169 = vsel %vm167, %v163, 0
    %v172 = vsel %vm167, %v164, 0
    %174 = vmatpush.msra.mxu0 0.0
    %175 = vmatpush.msra.mxu0 0.0
    %176 = vmatpush.msra.mxu0 0.0
    %177 = vmatpush.msra.mxu0 0.0
    %178 = vmatpush.msra.mxu0 0.0
    %179 = vmatpush.msra.mxu0 0.0
    %180 = vmatpush.msra.mxu0 0.0
    %181 = vmatpush.msra.mxu0 0.0
    %182 = vmatpush.msra.mxu0 0.0
    %183 = vmatpush.msra.mxu0 0.0
    %184 = vmatpush.msra.mxu0 0.0
    %185 = vmatpush.msra.mxu0 0.0
    %186 = vmatpush.msra.mxu0 0.0
    %187 = vmatpush.msra.mxu0 0.0
    %188 = vmatpush.msra.mxu0 0.0
    %189 = vmatpush.msra.mxu0 %v165
    %190 = vmatmul.f32.gmra.mxu0 %v169
    %v191 = vpop.f32.mrf.mxu0
    %v192 = vadd.f32 0.0, %v191
    %193 = vmatmul.f32.gmra.mxu0 %v172
    %v194 = vpop.f32.mrf.mxu0
    %v195 = vadd.f32 0.0, %v194
    %196 = vdwg.mxu0
    %197 = vmatpush.msra.mxu0 0.0
    %198 = vmatpush.msra.mxu0 0.0
    %199 = vmatpush.msra.mxu0 0.0
    %200 = vmatpush.msra.mxu0 0.0
    %201 = vmatpush.msra.mxu0 0.0
    %202 = vmatpush.msra.mxu0 0.0
    %203 = vmatpush.msra.mxu0 0.0
    %204 = vmatpush.msra.mxu0 0.0
    %205 = vmatpush.msra.mxu0 0.0
    %206 = vmatpush.msra.mxu0 0.0
    %207 = vmatpush.msra.mxu0 0.0
    %208 = vmatpush.msra.mxu0 0.0
    %209 = vmatpush.msra.mxu0 0.0
    %210 = vmatpush.msra.mxu0 0.0
    %211 = vmatpush.msra.mxu0 0.0
    %212 = vmatpush.msra.mxu0 %v166
    %213 = vmatmul.f32.gmra.mxu0 %v169
    %v214 = vpop.f32.mrf.mxu0
    %v215 = vadd.f32 0.0, %v214
    %216 = vmatmul.f32.gmra.mxu0 %v172
    %v217 = vpop.f32.mrf.mxu0
    %v218 = vadd.f32 0.0, %v217
    %219 = vdwg.mxu0
    %v220 = vld [vmem:[%s4] sm:$0xff]
    %v221 = vld [vmem:[%s4 + $0x8] sm:$0xff]
    %223 = vset.pattern.permute.xlu0 0
    %224 = vperm.xlu0 %223, %v220
    %v225 = vpop.permute.xlu0 %224
    %228 = vset.pattern.permute.xlu0 0
    %229 = vperm.xlu0 %228, %v221
    %v230 = vpop.permute.xlu0 %229
    %v232 = vadd.f32 %v192, %v225
    %v233 = vadd.f32 %v195, %v230
    %234 = vst [vmem:[#allocation4] sm:$0xff] %v232
    %235 = vst [vmem:[#allocation4 + $0x8] sm:$0xff] %v233
    %v236 = vadd.f32 %v215, %v225
    %v237 = vadd.f32 %v218, %v230
    %s238 = scalar_lea.vmem [#allocation4], 16
    %239 = vst [vmem:[%s238] sm:$0xff] %v236
    %240 = vst [vmem:[%s238 + $0x8] sm:$0xff] %v237
    // Predicated region
    $region22: #{tpu_custom_call.1} parent=1 // pred_check
      _
    $region23: #{tpu_custom_call.1} parent=1 // pred_check_branch
      %242 = sbr.rel (0) target = $region25
    $region24: #{tpu_custom_call.1} parent=1 // pred_region
      %244 = vsyncadd [#allocation5], 0
      %s245 = sshll.u32 [#allocation4], 4
      %s246 = int_to_ptr.vmem [resolvable:$true] %s245
      %s247 = sshll.u32 %s5, 4
      %s248 = int_to_ptr.hbm [resolvable:$true] %s247
      %253 = dma.vmem_to_hbm [thread:$0]  %s246, 512, %s248, [#allocation5], 128, 128, 8
    $region25: #{tpu_custom_call.1} parent=1 // pred_fallthru
      _
    // Predicated region
    $region26: #{tpu_custom_call.1} parent=1 // pred_check
      _
    $region27: #{tpu_custom_call.1} parent=1 // pred_check_branch
      %255 = sbr.rel (0) target = $region29
    $region28: #{tpu_custom_call.1} parent=1 // pred_region
      %257 = dma.done [#allocation5], 512
    $region29: #{tpu_custom_call.1} parent=1 // pred_fallthru
      _
    %258 = vsyncpa [#allocation5], 1

</llo_original>
